<compile_context>
chip_gen: v5e
topology: v5e:2x2
jax: 0.10.0
libtpu: 0.0.40
codegen_flags: <defaults>
</compile_context>

<pallas_src>
import functools

import jax
import jax.numpy as jnp
from jax.experimental import pallas as pl
from jax.experimental.pallas import tpu as pltpu


def _dummy_fused_kernel(x_ref, w_ref, b_ref, pol_ref, val_ref, *, action_size):
    # Cast the (possibly int8 / bf16) board tile to f32 in VMEM (free VPU slot
    # in this mem-bound regime).
    x = x_ref[...].astype(jnp.float32)                              # (tm, D)
    # One fused matmul for both heads: (tm, D) @ (D, A+1) + (1, A+1).
    y = jnp.dot(x, w_ref[...], preferred_element_type=jnp.float32) + b_ref[...]
    # Policy logits: first A columns, stored directly (no padded lanes).
    pol_ref[...] = y[:, :action_size].astype(pol_ref.dtype)
    # Value head: tanh on the single real value column only.
    val_ref[...] = jnp.tanh(y[:, action_size:action_size + 1]).astype(val_ref.dtype)


def _prepack_weights(w_pol, b_pol, w_val, b_val):
    """Fuse policy+value heads into one (D, A+1) weight and (1, A+1) bias."""
    w_fused = jnp.concatenate(
        [w_pol.astype(jnp.float32), w_val.astype(jnp.float32)], axis=1)
    b_fused = jnp.concatenate(
        [b_pol.astype(jnp.float32), b_val.astype(jnp.float32)], axis=0)
    return w_fused, b_fused.reshape(1, -1)


def dummy_forward(board, w_pol, b_pol, w_val, b_val, *, tm_max=8192):
    """board: (B, 2, H, L), any float/int dtype (cast to f32 in-kernel).
    w_pol: (D, A), b_pol: (A,), w_val: (D, 1), b_val: (1,), D = 2*H*L.
    Returns (out_pol (B, A) f32, out_val (B, 1) f32)."""
    B = board.shape[0]
    D = board.shape[1] * board.shape[2] * board.shape[3]
    A = w_pol.shape[1]

    # Native-dtype flatten only (no f32 HBM copy of the board).
    x = board.reshape(B, D)
    w_fused, b_fused = _prepack_weights(w_pol, b_pol, w_val, b_val)

    # Batch tile: full-B block for small B (block == full dim is always legal),
    # otherwise tm_max rows (multiple of 8); ragged last block is masked by
    # Pallas on the output stores.
    tm = B if B <= tm_max else tm_max
    grid = (pl.cdiv(B, tm),)

    out_pol, out_val = pl.pallas_call(
        functools.partial(_dummy_fused_kernel, action_size=A),
        out_shape=(
            jax.ShapeDtypeStruct((B, A), jnp.float32),
            jax.ShapeDtypeStruct((B, 1), jnp.float32),
        ),
        grid_spec=pltpu.PrefetchScalarGridSpec(
            num_scalar_prefetch=0,
            grid=grid,
            in_specs=[
                pl.BlockSpec((tm, D), lambda i: (i, 0)),        # x: tiled over batch
                pl.BlockSpec((D, A + 1), lambda i: (0, 0)),     # fused weight: resident
                pl.BlockSpec((1, A + 1), lambda i: (0, 0)),     # fused bias:   resident
            ],
            out_specs=[
                pl.BlockSpec((tm, A), lambda i: (i, 0)),        # policy logits
                pl.BlockSpec((tm, 1), lambda i: (i, 0)),        # tanh(value)
            ],
        ),
        compiler_params=pltpu.CompilerParams(
            dimension_semantics=("parallel",),
        ),
    )(x, w_fused, b_fused)

    return out_pol, out_val


if __name__ == "__main__":
    # Small "game": height=6, length=7 (connect-4 style), action_size=7.
    B, H, L, A = 4, 6, 7, 7
    D = 2 * H * L

    key = jax.random.PRNGKey(0)
    k_board, k_wp, k_bp, k_wv, k_bv = jax.random.split(key, 5)

    # Board in its smallest faithful dtype (int8 occupancy planes), NCHW.
    board = jax.random.bernoulli(k_board, 0.3, (B, 2, H, L)).astype(jnp.int8)

    # Deterministic parameter init; stored as (in_features, out_features).
    w_pol = jax.random.normal(k_wp, (D, A), dtype=jnp.float32) * 0.05
    b_pol = jax.random.normal(k_bp, (A,), dtype=jnp.float32) * 0.05
    w_val = jax.random.normal(k_wv, (D, 1), dtype=jnp.float32) * 0.05
    b_val = jax.random.normal(k_bv, (1,), dtype=jnp.float32) * 0.05

    out_pol, out_val = dummy_forward(board, w_pol, b_pol, w_val, b_val)
    jax.block_until_ready((out_pol, out_val))

    # Cross-check against a plain-JAX reference (board.float() -> two Linears).
    x = board.reshape(B, D).astype(jnp.float32)
    ref_pol = x @ w_pol + b_pol
    ref_val = jnp.tanh(x @ w_val + b_val)
    assert out_pol.shape == (B, A) and out_val.shape == (B, 1)
    assert jnp.allclose(out_pol, ref_pol, atol=1e-5)
    assert jnp.allclose(out_val, ref_val, atol=1e-5)

    print("KERNEL_OK")
</pallas_src>

<mosaic_0001>
module attributes {stable_mosaic.version = 11 : i64} {
  func.func @_dummy_fused_kernel(%arg0: i32, %arg1: memref<4x84xi8, #tpu.memory_space<vmem>>, %arg2: memref<84x8xf32, #tpu.memory_space<vmem>>, %arg3: memref<1x8xf32, #tpu.memory_space<vmem>>, %arg4: memref<4x7xf32, #tpu.memory_space<vmem>>, %arg5: memref<4x1xf32, #tpu.memory_space<vmem>>) attributes {dimension_semantics = [#tpu.dimension_semantics<parallel>], iteration_bounds = array<i64: 1>, scalar_prefetch = 0 : i64, scratch_operands = 0 : i64, tpu.core_type = #tpu.core_type<tc>, window_params = [{transform_indices = @transform_0, window_bounds = array<i64: 4, 84>}, {pipeline_mode = #tpu.pipeline_mode<synchronous>, transform_indices = @transform_1, window_bounds = array<i64: 84, 8>}, {pipeline_mode = #tpu.pipeline_mode<synchronous>, transform_indices = @transform_2, window_bounds = array<i64: 1, 8>}, {transform_indices = @transform_3, window_bounds = array<i64: 4, 7>}, {transform_indices = @transform_4, window_bounds = array<i64: 4, 1>}]} {
    %c0 = arith.constant 0 : index
    %c0_0 = arith.constant 0 : index
    %0 = vector.load %arg1[%c0, %c0_0] : memref<4x84xi8, #tpu.memory_space<vmem>>, vector<4x84xi8>
    %1 = arith.sitofp %0 : vector<4x84xi8> to vector<4x84xf32>
    %c0_1 = arith.constant 0 : index
    %c0_2 = arith.constant 0 : index
    %2 = vector.load %arg2[%c0_1, %c0_2] : memref<84x8xf32, #tpu.memory_space<vmem>>, vector<84x8xf32>
    %cst = arith.constant dense<0.000000e+00> : vector<4x8xf32>
    %3 = tpu.matmul %1, %2, %cst {dimension_numbers = #tpu.dot_dimension_numbers<[1], [0], [0], [1], [0, 0, 1, 1], [], []>} : vector<4x84xf32>, vector<84x8xf32>, vector<4x8xf32> -> vector<4x8xf32>
    %c0_3 = arith.constant 0 : index
    %c0_4 = arith.constant 0 : index
    %4 = vector.load %arg3[%c0_3, %c0_4] : memref<1x8xf32, #tpu.memory_space<vmem>>, vector<1x8xf32>
    %5 = vector.broadcast %4 : vector<1x8xf32> to vector<4x8xf32>
    %6 = arith.addf %3, %5 : vector<4x8xf32>
    %7 = vector.extract_strided_slice %6 {offsets = [0, 0], sizes = [4, 7], strides = [1, 1]} : vector<4x8xf32> to vector<4x7xf32>
    %c0_5 = arith.constant 0 : index
    %c0_6 = arith.constant 0 : index
    %8 = vector.load %arg4[%c0_5, %c0_6] : memref<4x7xf32, #tpu.memory_space<vmem>>, vector<4x7xf32>
    tpu.vector_store %arg4[%c0_5, %c0_6], %7 {strides = array<i32>} : memref<4x7xf32, #tpu.memory_space<vmem>>, vector<4x7xf32>,
    %9 = vector.extract_strided_slice %6 {offsets = [0, 7], sizes = [4, 1], strides = [1, 1]} : vector<4x8xf32> to vector<4x1xf32>
    %10 = math.tanh %9 : vector<4x1xf32>
    %c0_7 = arith.constant 0 : index
    %c0_8 = arith.constant 0 : index
    %11 = vector.load %arg5[%c0_7, %c0_8] : memref<4x1xf32, #tpu.memory_space<vmem>>, vector<4x1xf32>
    tpu.vector_store %arg5[%c0_7, %c0_8], %10 {strides = array<i32>} : memref<4x1xf32, #tpu.memory_space<vmem>>, vector<4x1xf32>,
    return
  }
  func.func @transform_0(%arg0: i32) -> (i32, i32) {
    %c0_i32 = arith.constant 0 : i32
    %c0_i32_0 = arith.constant 0 : i32
    return %arg0, %c0_i32 : i32, i32
  }
  func.func @transform_1(%arg0: i32) -> (i32, i32) {
    %c0_i32 = arith.constant 0 : i32
    %c0_i32_0 = arith.constant 0 : i32
    %c0_i32_1 = arith.constant 0 : i32
    return %c0_i32, %c0_i32_0 : i32, i32
  }
  func.func @transform_2(%arg0: i32) -> (i32, i32) {
    %c0_i32 = arith.constant 0 : i32
    %c0_i32_0 = arith.constant 0 : i32
    %c0_i32_1 = arith.constant 0 : i32
    return %c0_i32, %c0_i32_0 : i32, i32
  }
  func.func @transform_3(%arg0: i32) -> (i32, i32) {
    %c0_i32 = arith.constant 0 : i32
    %c0_i32_0 = arith.constant 0 : i32
    return %arg0, %c0_i32 : i32, i32
  }
  func.func @transform_4(%arg0: i32) -> (i32, i32) {
    %c0_i32 = arith.constant 0 : i32
    %c0_i32_0 = arith.constant 0 : i32
    return %arg0, %c0_i32 : i32, i32
  }
}

</mosaic_0001>

<llo_original>
// kernel: tpu_custom_call.1
$region0: #{tpu_custom_call.1}
  #allocation0 [shape = 'u32[]', space=smem, size = 0x4, offset = 0x4, fixed_abs, tag = 'smem constant byte address 0x4 - core index']
  #allocation1 [shape = 'u32[72,128]{1,0:T(1,128)}', space=vmem, size = 0x9000, scoped, tag = 'internal scratch']
  %s0 = inlined_call_operand.vmem [shape: s8[4,84], index: 0, kind: input, shape index: {}]
  %s1 = inlined_call_operand.vmem [shape: f32[84,8], index: 1, kind: input, shape index: {}]
  %s2 = inlined_call_operand.vmem [shape: f32[1,8], index: 2, kind: input, shape index: {}]
  %s3 = inlined_call_operand.hbm [shape: f32[4,7], index: 3, kind: output, shape index: {0}]
  %s4 = inlined_call_operand.vmem [shape: f32[4,1], index: 4, kind: output, shape index: {1}]
  %5 = xla_tuple %s3, %s4
  %s6 = sld [smem:[#allocation0]]
  $region30: #{tpu_custom_call.1} parent=0
    _
  %s8 = ssub.s32 1, %s6
  %s9 = scalar_select 0, %s8, %s6
  $region1: #{tpu_custom_call.1} parent=0
    #allocation2 [shape = 'u8[2048]{0}', space=vmem, size = 0x800, scoped, tag = 'output window, operand 0, single buffered']
    #allocation3 [shape = 's32[1]{0}', space=sflag, size = 0x4, scoped, tag = 'scoped memory for tpu_custom_call.1']
    %10 = vsyncpa [#allocation3], 0
    // Predicated region
    $region2: #{tpu_custom_call.1} parent=1 // pred_check
      _
    $region3: #{tpu_custom_call.1} parent=1 // pred_check_branch
      %12 = sbr.rel (0) target = $region5
    $region4: #{tpu_custom_call.1} parent=1 // pred_region
      _
    $region5: #{tpu_custom_call.1} parent=1 // pred_fallthru
      _
    // Predicated region
    $region6: #{tpu_custom_call.1} parent=1 // pred_check
      _
    $region7: #{tpu_custom_call.1} parent=1 // pred_check_branch
      %14 = sbr.rel (0) target = $region9
    $region8: #{tpu_custom_call.1} parent=1 // pred_region
      _
    $region9: #{tpu_custom_call.1} parent=1 // pred_fallthru
      _
    // Predicated region
    $region10: #{tpu_custom_call.1} parent=1 // pred_check
      _
    $region11: #{tpu_custom_call.1} parent=1 // pred_check_branch
      %16 = sbr.rel (0) target = $region13
    $region12: #{tpu_custom_call.1} parent=1 // pred_region
      _
    $region13: #{tpu_custom_call.1} parent=1 // pred_fallthru
      _
    %v17 = vld [vmem:[%s0] sm:$0x1]
    %v18 = vunpack.c.0.s8 %v17
    %v19 = vcvt.s32.f32 %v18
    %v20 = vld [vmem:[%s1] sm:$0xff]
    %v21 = vld [vmem:[%s1 + $0x8] sm:$0xff]
    %v22 = vld [vmem:[%s1 + $0x10] sm:$0xff]
    %v23 = vld [vmem:[%s1 + $0x18] sm:$0xff]
    %v24 = vld [vmem:[%s1 + $0x20] sm:$0xff]
    %v25 = vld [vmem:[%s1 + $0x28] sm:$0xff]
    %v26 = vld [vmem:[%s1 + $0x30] sm:$0xff]
    %v27 = vld [vmem:[%s1 + $0x38] sm:$0xff]
    %v28 = vld [vmem:[%s1 + $0x40] sm:$0xff]
    %v29 = vld [vmem:[%s1 + $0x48] sm:$0xff]
    %v30 = vld [vmem:[%s1 + $0x50] sm:$0xf]
    %v31 = vld [vmem:[%s2] sm:$0x1]
    %v33 = vperm.slane %v31, 0
    %vm35 = vcmask 687104
    %v37 = vsel %vm35, %v19, 0
    %vm39 = vcmask 1043456
    %v41 = vsel %vm39, %v30, 0
    %43 = vmatpush.msra.mxu0 0.0
    %44 = vmatpush.msra.mxu0 0.0
    %45 = vmatpush.msra.mxu0 0.0
    %46 = vmatpush.msra.mxu0 0.0
    %47 = vmatpush.msra.mxu0 0.0
    %48 = vmatpush.msra.mxu0 %v41
    %49 = vmatpush.msra.mxu0 %v29
    %50 = vmatpush.msra.mxu0 %v28
    %51 = vmatpush.msra.mxu0 %v27
    %52 = vmatpush.msra.mxu0 %v26
    %53 = vmatpush.msra.mxu0 %v25
    %54 = vmatpush.msra.mxu0 %v24
    %55 = vmatpush.msra.mxu0 %v23
    %56 = vmatpush.msra.mxu0 %v22
    %57 = vmatpush.msra.mxu0 %v21
    %58 = vmatpush.msra.mxu0 %v20
    %59 = vmatmul.f32.gmra.mxu0 %v37
    %v60 = vpop.f32.mrf.mxu0
    %v61 = vadd.f32 %v33, %v60
    %62 = vdwg.mxu0
    %vm63 = vcmask 52224
    %64 = vst.msk [vmem:[#allocation2] sm:$0xf] %vm63, %v61
    %v65 = vtanh.pop %v61
    %67 = vrot.lane.b32.xlu0 %v65, 121
    %v68 = vpop.permute.xlu0 %67
    %vm70 = vcmask 3072
    %71 = vst.msk [vmem:[%s4] sm:$0xf] %vm70, %v68
    // Predicated region
    $region14: #{tpu_custom_call.1} parent=1 // pred_check
      _
    $region15: #{tpu_custom_call.1} parent=1 // pred_check_branch
      %73 = sbr.rel (0) target = $region17
    $region16: #{tpu_custom_call.1} parent=1 // pred_region
      %75 = vsyncadd [#allocation3], 0
      %s77 = sshll.u32 [#allocation2], 4
      %s78 = int_to_ptr.vmem [resolvable:$true] %s77
      %s79 = sshll.u32 %s3, 4
      %s80 = int_to_ptr.hbm [resolvable:$true] %s79
      %82 = dma.vmem_to_hbm [thread:$0]  %s78, 64, %s80, [#allocation3]
    $region17: #{tpu_custom_call.1} parent=1 // pred_fallthru
      _
    // Predicated region
    $region18: #{tpu_custom_call.1} parent=1 // pred_check
      _
    $region19: #{tpu_custom_call.1} parent=1 // pred_check_branch
      %84 = sbr.rel (0) target = $region21
    $region20: #{tpu_custom_call.1} parent=1 // pred_region
      _
    $region21: #{tpu_custom_call.1} parent=1 // pred_fallthru
      _
    // Predicated region
    $region22: #{tpu_custom_call.1} parent=1 // pred_check
      _
    $region23: #{tpu_custom_call.1} parent=1 // pred_check_branch
      %86 = sbr.rel (0) target = $region25
    $region24: #{tpu_custom_call.1} parent=1 // pred_region
      %88 = dma.done [#allocation3], 64
    $region25: #{tpu_custom_call.1} parent=1 // pred_fallthru
      _
    // Predicated region
    $region26: #{tpu_custom_call.1} parent=1 // pred_check
      _
    $region27: #{tpu_custom_call.1} parent=1 // pred_check_branch
      %90 = sbr.rel (0) target = $region29
    $region28: #{tpu_custom_call.1} parent=1 // pred_region
      _
    $region29: #{tpu_custom_call.1} parent=1 // pred_fallthru
      _
    %91 = vsyncpa [#allocation3], 1

</llo_original>
